<compile_context>
chip_gen: v7x
topology: tpu7x:2x2x1
jax: 0.10.0
libtpu: 0.0.40
codegen_flags: <defaults>
</compile_context>

<pallas_src>
import functools

import jax
import jax.numpy as jnp
from jax import lax
from jax.experimental import pallas as pl
from jax.experimental.pallas import tpu as pltpu

_EPS = 1e-6
_LANE = 128
# Per-input, per-pipeline-buffer VMEM byte budget for one tile.
# 2 inputs x 2 buffers x 4 MiB = 16 MiB pipelined -> fits every generation
# once vmem_limit_bytes is raised, and stays under the ~24 MiB v7x guidance.
_TILE_BYTES = 4 * 1024 * 1024
_VMEM_LIMIT = 32 * 1024 * 1024


def _sublane_pack(*dtypes):
    """Row granularity matching sublane packing: 8 (4B), 16 (2B), 32 (1B)."""
    pack = 8
    for dt in dtypes:
        pack = max(pack, 32 // max(jnp.dtype(dt).itemsize, 1))
    return pack


def _dice_partial_kernel(x_ref, t_ref, inter_ref, sets_ref, inter_acc, sets_acc,
                         *, rows_total, block_rows, chunk, lanes,
                         n_full, tail, needs_mask, unroll):
    k = pl.program_id(2)
    n_tiles = pl.num_programs(2)

    # Zero the per-(n, c) accumulators at the first row-tile.
    @pl.when(k == 0)
    def _():
        inter_acc[...] = jnp.zeros_like(inter_acc)
        sets_acc[...] = jnp.zeros_like(sets_acc)

    if needs_mask:
        # Hoisted once per block; OOB rows of a ragged last block are garbage
        # in VMEM and must be zeroed before accumulating.
        row_iota = lax.broadcasted_iota(jnp.int32, (chunk, lanes), 0)
        row_base = k * block_rows

    def _load(off, size):
        xv = x_ref[0, 0, pl.ds(off, size), :].astype(jnp.float32)
        tv = t_ref[0, 0, pl.ds(off, size), :].astype(jnp.float32)
        return xv, tv

    def _chunk_body(i, carry):
        ia, sa = carry
        off = pl.multiple_of(i * chunk, chunk)
        xv, tv = _load(off, chunk)
        if needs_mask:
            valid = (row_base + off + row_iota) < rows_total
            xv = jnp.where(valid, xv, 0.0)
            tv = jnp.where(valid, tv, 0.0)
        # Fused single pass: x and t are read once for both reductions.
        return ia + xv * tv, sa + (xv + tv)

    init = (jnp.zeros((chunk, lanes), jnp.float32),
            jnp.zeros((chunk, lanes), jnp.float32))
    if n_full > 0:
        ia, sa = lax.fori_loop(0, n_full, _chunk_body, init, unroll=unroll)
    else:
        ia, sa = init
    inter_acc[...] += ia
    sets_acc[...] += sa

    if tail > 0:
        # Static remainder chunk.  By construction the tail only exists in the
        # single full-extent-block case, so there are no OOB rows to mask.
        off = n_full * chunk
        xv, tv = _load(off, tail)
        inter_acc[pl.ds(0, tail), :] += xv * tv
        sets_acc[pl.ds(0, tail), :] += xv + tv

    # Finalize once per (n, c): single cross-lane reduction to the tiny outputs.
    @pl.when(k == n_tiles - 1)
    def _():
        inter_ref[...] = jnp.full((1, 1, 1, 1), jnp.sum(inter_acc[...]), jnp.float32)
        sets_ref[...] = jnp.full((1, 1, 1, 1), jnp.sum(sets_acc[...]), jnp.float32)


def dice_loss(inp, tgt, *, block_rows=None, epsilon=_EPS):
    """Pallas implementation of 1 - multiclass_dice_coeff(inp, tgt)."""
    assert inp.shape == tgt.shape
    N, C, H, W = inp.shape
    L = H * W
    chunk = _sublane_pack(inp.dtype, tgt.dtype)
    itemsize = max(jnp.dtype(inp.dtype).itemsize, jnp.dtype(tgt.dtype).itemsize)

    if L % _LANE == 0:
        # Free contiguous reshape: flatten HxW into lane-dense (rows, 128).
        rows, lanes = L // _LANE, _LANE
        x = inp.reshape(N, C, rows, lanes)
        t = tgt.reshape(N, C, rows, lanes)
    else:
        # Consume NCHW directly (W -> lanes): no HBM pad/copy for unaligned sizes.
        rows, lanes = H, W
        x, t = inp, tgt

    # Biggest row-block that fits the per-buffer VMEM byte budget, rounded to
    # the dtype's sublane packing.
    lanes_padded = -(-lanes // _LANE) * _LANE
    if block_rows is None:
        block_rows = (_TILE_BYTES // (lanes_padded * itemsize)) // chunk * chunk
    else:
        block_rows = (block_rows // chunk) * chunk
    block_rows = max(block_rows, chunk)

    if rows <= block_rows:
        r = rows                       # single full-extent block: no OOB rows
        n_tiles = 1
    else:
        r = block_rows                 # multiple of `chunk`
        n_tiles = pl.cdiv(rows, r)
    n_full, tail = r // chunk, r % chunk
    needs_mask = (n_tiles > 1) and (rows % r != 0)
    assert not (tail and needs_mask)
    unroll = max(1, min(8, n_full))

    kernel = functools.partial(
        _dice_partial_kernel,
        rows_total=rows, block_rows=r, chunk=chunk, lanes=lanes,
        n_full=n_full, tail=tail, needs_mask=needs_mask, unroll=unroll)

    bytes_in = (x.size * jnp.dtype(x.dtype).itemsize
                + t.size * jnp.dtype(t.dtype).itemsize)
    cost = pl.CostEstimate(flops=3 * N * C * L, transcendentals=0,
                           bytes_accessed=bytes_in + 2 * N * C * 4)

    part = jax.ShapeDtypeStruct((N, C, 1, 1), jnp.float32)
    inter_nc, sets_nc = pl.pallas_call(
        kernel,
        out_shape=(part, part),
        grid_spec=pltpu.PrefetchScalarGridSpec(
            num_scalar_prefetch=0,
            grid=(N, C, n_tiles),
            in_specs=[
                pl.BlockSpec((1, 1, r, lanes), lambda n, c, k: (n, c, k, 0)),
                pl.BlockSpec((1, 1, r, lanes), lambda n, c, k: (n, c, k, 0)),
            ],
            out_specs=[
                pl.BlockSpec((1, 1, 1, 1), lambda n, c, k: (n, c, 0, 0)),
                pl.BlockSpec((1, 1, 1, 1), lambda n, c, k: (n, c, 0, 0)),
            ],
            scratch_shapes=[
                pltpu.VMEM((chunk, lanes), jnp.float32),  # intersection partials
                pltpu.VMEM((chunk, lanes), jnp.float32),  # sum_x + sum_t partials
            ],
        ),
        compiler_params=pltpu.CompilerParams(
            dimension_semantics=("parallel", "parallel", "arbitrary"),
            vmem_limit_bytes=_VMEM_LIMIT,
        ),
        cost_estimate=cost,
    )(x, t)

    # Tiny epilogue in plain JAX (mirrors the PyTorch per-channel dice + mean).
    inter_c = jnp.sum(inter_nc[:, :, 0, 0], axis=0)
    sets_c = jnp.sum(sets_nc[:, :, 0, 0], axis=0)
    dice_c = jnp.where(sets_c == 0.0, jnp.float32(1.0),
                       (2.0 * inter_c + epsilon) / (sets_c + epsilon))
    return 1.0 - jnp.mean(dice_c)


def _dice_loss_ref(inp, tgt, eps=_EPS):
    """Pure-JAX reference mirroring the PyTorch code."""
    inp = inp.astype(jnp.float32)
    tgt = tgt.astype(jnp.float32)
    C = inp.shape[1]
    dice = jnp.float32(0.0)
    for c in range(C):
        xv = inp[:, c].reshape(-1)
        tv = tgt[:, c].reshape(-1)
        inter = jnp.dot(xv, tv)
        sets_sum = jnp.sum(xv) + jnp.sum(tv)
        d = jnp.where(sets_sum == 0, 1.0, (2.0 * inter + eps) / (sets_sum + eps))
        dice = dice + d
    return 1.0 - dice / C


if __name__ == "__main__":
    key = jax.random.PRNGKey(0)
    k1, k2, k3, k4, k5 = jax.random.split(key, 5)

    # Case 1: f32, lane-aligned spatial size (H*W % 128 == 0), single tile.
    N, C, H, W = 2, 4, 16, 16
    logits = jax.random.normal(k1, (N, C, H, W), dtype=jnp.float32)
    inp = jax.nn.softmax(logits, axis=1)
    classes = jax.random.randint(k2, (N, H, W), 0, C)
    tgt = jax.nn.one_hot(classes, C, axis=1, dtype=jnp.float32)
    loss = jax.block_until_ready(dice_loss(inp, tgt))
    ref = jax.block_until_ready(_dice_loss_ref(inp, tgt))
    assert jnp.allclose(loss, ref, atol=1e-5, rtol=1e-5), (loss, ref)

    # Case 2: bf16, non-aligned spatial size -> NCHW consumed directly
    # (no pad, W maps to lanes), single full-extent tile, 16-row sublane pack.
    N2, C2, H2, W2 = 2, 3, 13, 13
    logits2 = jax.random.normal(k3, (N2, C2, H2, W2), dtype=jnp.float32)
    inp2 = jax.nn.softmax(logits2, axis=1).astype(jnp.bfloat16)
    classes2 = jax.random.randint(k4, (N2, H2, W2), 0, C2)
    tgt2 = jax.nn.one_hot(classes2, C2, axis=1, dtype=jnp.bfloat16)
    loss2 = jax.block_until_ready(dice_loss(inp2, tgt2))
    ref2 = jax.block_until_ready(_dice_loss_ref(inp2, tgt2))
    assert jnp.allclose(loss2, ref2, atol=1e-4, rtol=1e-4), (loss2, ref2)

    # Case 3: forced multi-tile path with a ragged (in-kernel masked) last block.
    N3, C3, H3, W3 = 1, 2, 13, 128
    inp3 = jax.random.uniform(k5, (N3, C3, H3, W3), dtype=jnp.float32)
    tgt3 = jax.random.uniform(jax.random.PRNGKey(1), (N3, C3, H3, W3),
                              dtype=jnp.float32)
    loss3 = jax.block_until_ready(dice_loss(inp3, tgt3, block_rows=8))
    ref3 = jax.block_until_ready(_dice_loss_ref(inp3, tgt3))
    assert jnp.allclose(loss3, ref3, atol=1e-5, rtol=1e-5), (loss3, ref3)

    # Case 4: all-zero channels exercise the sets_sum == 0 -> dice = 1 branch.
    z = jnp.zeros((1, 2, 8, 16), jnp.float32)
    loss4 = jax.block_until_ready(dice_loss(z, z))
    ref4 = jax.block_until_ready(_dice_loss_ref(z, z))
    assert jnp.allclose(loss4, ref4, atol=1e-6), (loss4, ref4)
    assert jnp.allclose(loss4, 0.0, atol=1e-6), loss4

    print("KERNEL_OK")
</pallas_src>

<mosaic_0001>
module attributes {stable_mosaic.version = 11 : i64} {
  func.func @_dice_partial_kernel(%arg0: i32, %arg1: i32, %arg2: i32, %arg3: memref<1x1x2x128xf32, #tpu.memory_space<vmem>>, %arg4: memref<1x1x2x128xf32, #tpu.memory_space<vmem>>, %arg5: memref<1x1x1x1xf32, #tpu.memory_space<vmem>>, %arg6: memref<1x1x1x1xf32, #tpu.memory_space<vmem>>, %arg7: memref<8x128xf32, #tpu.memory_space<vmem>>, %arg8: memref<8x128xf32, #tpu.memory_space<vmem>>) attributes {dimension_semantics = [#tpu.dimension_semantics<parallel>, #tpu.dimension_semantics<parallel>, #tpu.dimension_semantics<arbitrary>], iteration_bounds = array<i64: 2, 4, 1>, scalar_prefetch = 0 : i64, scratch_operands = 2 : i64, tpu.core_type = #tpu.core_type<tc>, window_params = [{transform_indices = @transform_0, window_bounds = array<i64: 1, 1, 2, 128>}, {transform_indices = @transform_1, window_bounds = array<i64: 1, 1, 2, 128>}, {transform_indices = @transform_2, window_bounds = array<i64: 1, 1, 1, 1>}, {transform_indices = @transform_3, window_bounds = array<i64: 1, 1, 1, 1>}]} {
    %c0_i32 = arith.constant 0 : i32
    %0 = arith.cmpi eq, %arg2, %c0_i32 : i32
    %1 = arith.extui %0 : i1 to i32
    %c0_i32_0 = arith.constant 0 : i32
    %2 = arith.cmpi ne, %1, %c0_i32_0 : i32
    scf.if %2 {
      %cst_27 = arith.constant 0.000000e+00 : f32
      %26 = vector.broadcast %cst_27 : f32 to vector<8x128xf32>
      %c0_28 = arith.constant 0 : index
      %c0_29 = arith.constant 0 : index
      %27 = vector.load %arg7[%c0_28, %c0_29] : memref<8x128xf32, #tpu.memory_space<vmem>>, vector<8x128xf32>
      tpu.vector_store %arg7[%c0_28, %c0_29], %26 {strides = array<i32>} : memref<8x128xf32, #tpu.memory_space<vmem>>, vector<8x128xf32>,
      %cst_30 = arith.constant 0.000000e+00 : f32
      %28 = vector.broadcast %cst_30 : f32 to vector<8x128xf32>
      %c0_31 = arith.constant 0 : index
      %c0_32 = arith.constant 0 : index
      %29 = vector.load %arg8[%c0_31, %c0_32] : memref<8x128xf32, #tpu.memory_space<vmem>>, vector<8x128xf32>
      tpu.vector_store %arg8[%c0_31, %c0_32], %28 {strides = array<i32>} : memref<8x128xf32, #tpu.memory_space<vmem>>, vector<8x128xf32>,
    } else {
    }
    %cst = arith.constant 0.000000e+00 : f32
    %3 = vector.broadcast %cst : f32 to vector<8x128xf32>
    %cst_1 = arith.constant 0.000000e+00 : f32
    %4 = vector.broadcast %cst_1 : f32 to vector<8x128xf32>
    %c0 = arith.constant 0 : index
    %c0_2 = arith.constant 0 : index
    %5 = vector.load %arg7[%c0, %c0_2] : memref<8x128xf32, #tpu.memory_space<vmem>>, vector<8x128xf32>
    %6 = arith.addf %5, %3 : vector<8x128xf32>
    %c0_3 = arith.constant 0 : index
    %c0_4 = arith.constant 0 : index
    %7 = vector.load %arg7[%c0_3, %c0_4] : memref<8x128xf32, #tpu.memory_space<vmem>>, vector<8x128xf32>
    tpu.vector_store %arg7[%c0_3, %c0_4], %6 {strides = array<i32>} : memref<8x128xf32, #tpu.memory_space<vmem>>, vector<8x128xf32>,
    %c0_5 = arith.constant 0 : index
    %c0_6 = arith.constant 0 : index
    %8 = vector.load %arg8[%c0_5, %c0_6] : memref<8x128xf32, #tpu.memory_space<vmem>>, vector<8x128xf32>
    %9 = arith.addf %8, %4 : vector<8x128xf32>
    %c0_7 = arith.constant 0 : index
    %c0_8 = arith.constant 0 : index
    %10 = vector.load %arg8[%c0_7, %c0_8] : memref<8x128xf32, #tpu.memory_space<vmem>>, vector<8x128xf32>
    tpu.vector_store %arg8[%c0_7, %c0_8], %9 {strides = array<i32>} : memref<8x128xf32, #tpu.memory_space<vmem>>, vector<8x128xf32>,
    %c0_9 = arith.constant 0 : index
    %c0_10 = arith.constant 0 : index
    %c0_11 = arith.constant 0 : index
    %c0_12 = arith.constant 0 : index
    %11 = vector.load %arg3[%c0_9, %c0_10, %c0_11, %c0_12] : memref<1x1x2x128xf32, #tpu.memory_space<vmem>>, vector<1x1x2x128xf32>
    %12 = vector.shape_cast %11 : vector<1x1x2x128xf32> to vector<2x128xf32>
    %c0_13 = arith.constant 0 : index
    %c0_14 = arith.constant 0 : index
    %c0_15 = arith.constant 0 : index
    %c0_16 = arith.constant 0 : index
    %13 = vector.load %arg4[%c0_13, %c0_14, %c0_15, %c0_16] : memref<1x1x2x128xf32, #tpu.memory_space<vmem>>, vector<1x1x2x128xf32>
    %14 = vector.shape_cast %13 : vector<1x1x2x128xf32> to vector<2x128xf32>
    %c0_17 = arith.constant 0 : index
    %c0_18 = arith.constant 0 : index
    %15 = vector.load %arg7[%c0_17, %c0_18] : memref<8x128xf32, #tpu.memory_space<vmem>>, vector<2x128xf32>
    %16 = arith.mulf %12, %14 : vector<2x128xf32>
    %17 = arith.addf %15, %16 : vector<2x128xf32>
    %c0_19 = arith.constant 0 : index
    %c0_20 = arith.constant 0 : index
    %18 = vector.load %arg7[%c0_19, %c0_20] : memref<8x128xf32, #tpu.memory_space<vmem>>, vector<2x128xf32>
    tpu.vector_store %arg7[%c0_19, %c0_20], %17 {strides = array<i32>} : memref<8x128xf32, #tpu.memory_space<vmem>>, vector<2x128xf32>,
    %c0_21 = arith.constant 0 : index
    %c0_22 = arith.constant 0 : index
    %19 = vector.load %arg8[%c0_21, %c0_22] : memref<8x128xf32, #tpu.memory_space<vmem>>, vector<2x128xf32>
    %20 = arith.addf %12, %14 : vector<2x128xf32>
    %21 = arith.addf %19, %20 : vector<2x128xf32>
    %c0_23 = arith.constant 0 : index
    %c0_24 = arith.constant 0 : index
    %22 = vector.load %arg8[%c0_23, %c0_24] : memref<8x128xf32, #tpu.memory_space<vmem>>, vector<2x128xf32>
    tpu.vector_store %arg8[%c0_23, %c0_24], %21 {strides = array<i32>} : memref<8x128xf32, #tpu.memory_space<vmem>>, vector<2x128xf32>,
    %c0_i32_25 = arith.constant 0 : i32
    %23 = arith.cmpi eq, %arg2, %c0_i32_25 : i32
    %24 = arith.extui %23 : i1 to i32
    %c0_i32_26 = arith.constant 0 : i32
    %25 = arith.cmpi ne, %24, %c0_i32_26 : i32
    scf.if %25 {
      %c0_27 = arith.constant 0 : index
      %c0_28 = arith.constant 0 : index
      %26 = vector.load %arg7[%c0_27, %c0_28] : memref<8x128xf32, #tpu.memory_space<vmem>>, vector<8x128xf32>
      %27 = vector.shape_cast %26 : vector<8x128xf32> to vector<1x8x128xf32>
      %cst_29 = arith.constant dense<0.000000e+00> : vector<1xf32>
      %28 = vector.multi_reduction <add>, %27, %cst_29 [1, 2] : vector<1x8x128xf32> to vector<1xf32>
      %29 = vector.shape_cast %28 : vector<1xf32> to vector<1x1x1xf32>
      %30 = vector.extract %29[0, 0, 0] : f32 from vector<1x1x1xf32>
      %31 = vector.broadcast %30 : f32 to vector<1x1x1x1xf32>
      %c0_30 = arith.constant 0 : index
      %c0_31 = arith.constant 0 : index
      %c0_32 = arith.constant 0 : index
      %c0_33 = arith.constant 0 : index
      %32 = vector.load %arg5[%c0_30, %c0_31, %c0_32, %c0_33] : memref<1x1x1x1xf32, #tpu.memory_space<vmem>>, vector<1x1x1x1xf32>
      tpu.vector_store %arg5[%c0_30, %c0_31, %c0_32, %c0_33], %31 {strides = array<i32>} : memref<1x1x1x1xf32, #tpu.memory_space<vmem>>, vector<1x1x1x1xf32>,
      %c0_34 = arith.constant 0 : index
      %c0_35 = arith.constant 0 : index
      %33 = vector.load %arg8[%c0_34, %c0_35] : memref<8x128xf32, #tpu.memory_space<vmem>>, vector<8x128xf32>
      %34 = vector.shape_cast %33 : vector<8x128xf32> to vector<1x8x128xf32>
      %cst_36 = arith.constant dense<0.000000e+00> : vector<1xf32>
      %35 = vector.multi_reduction <add>, %34, %cst_36 [1, 2] : vector<1x8x128xf32> to vector<1xf32>
      %36 = vector.shape_cast %35 : vector<1xf32> to vector<1x1x1xf32>
      %37 = vector.extract %36[0, 0, 0] : f32 from vector<1x1x1xf32>
      %38 = vector.broadcast %37 : f32 to vector<1x1x1x1xf32>
      %c0_37 = arith.constant 0 : index
      %c0_38 = arith.constant 0 : index
      %c0_39 = arith.constant 0 : index
      %c0_40 = arith.constant 0 : index
      %39 = vector.load %arg6[%c0_37, %c0_38, %c0_39, %c0_40] : memref<1x1x1x1xf32, #tpu.memory_space<vmem>>, vector<1x1x1x1xf32>
      tpu.vector_store %arg6[%c0_37, %c0_38, %c0_39, %c0_40], %38 {strides = array<i32>} : memref<1x1x1x1xf32, #tpu.memory_space<vmem>>, vector<1x1x1x1xf32>,
    } else {
    }
    return
  }
  func.func @transform_0(%arg0: i32, %arg1: i32, %arg2: i32) -> (i32, i32, i32, i32) {
    %c0_i32 = arith.constant 0 : i32
    %c0_i32_0 = arith.constant 0 : i32
    return %arg0, %arg1, %arg2, %c0_i32 : i32, i32, i32, i32
  }
  func.func @transform_1(%arg0: i32, %arg1: i32, %arg2: i32) -> (i32, i32, i32, i32) {
    %c0_i32 = arith.constant 0 : i32
    %c0_i32_0 = arith.constant 0 : i32
    return %arg0, %arg1, %arg2, %c0_i32 : i32, i32, i32, i32
  }
  func.func @transform_2(%arg0: i32, %arg1: i32, %arg2: i32) -> (i32, i32, i32, i32) {
    %c0_i32 = arith.constant 0 : i32
    %c0_i32_0 = arith.constant 0 : i32
    %c0_i32_1 = arith.constant 0 : i32
    return %arg0, %arg1, %c0_i32, %c0_i32_0 : i32, i32, i32, i32
  }
  func.func @transform_3(%arg0: i32, %arg1: i32, %arg2: i32) -> (i32, i32, i32, i32) {
    %c0_i32 = arith.constant 0 : i32
    %c0_i32_0 = arith.constant 0 : i32
    %c0_i32_1 = arith.constant 0 : i32
    return %arg0, %arg1, %c0_i32, %c0_i32_0 : i32, i32, i32, i32
  }
}

</mosaic_0001>

<llo_original>
// kernel: tpu_custom_call.1
$region0: #{tpu_custom_call.1}
  #allocation0 [shape = 'u32[]', space=smem, size = 0x4, offset = 0x4, fixed_abs, tag = 'smem constant byte address 0x4 - core index']
  #allocation1 [shape = 'u32[144,128]{1,0:T(1,128)}', space=vmem, size = 0x12000, scoped, tag = 'internal scratch']
  #allocation2 [shape = 'f32[8,128]{1,0:T(8,128)}', space=vmem, size = 0x1000, scoped, tag = 'scratch operand']
  #allocation3 [shape = 'f32[8,128]{1,0:T(8,128)}', space=vmem, size = 0x1000, scoped, tag = 'scratch operand']
  %s0 = inlined_call_operand.hbm [shape: f32[2,4,2,128], index: 0, kind: input, shape index: {}]
  %s1 = inlined_call_operand.hbm [shape: f32[2,4,2,128], index: 1, kind: input, shape index: {}]
  %s2 = inlined_call_operand.vmem [shape: f32[2,4,1,1], index: 2, kind: output, shape index: {0}]
  %s3 = inlined_call_operand.vmem [shape: f32[2,4,1,1], index: 3, kind: output, shape index: {1}]
  %4 = xla_tuple %s2, %s3
  %s5 = sld [smem:[#allocation0]]
  $region65: #{tpu_custom_call.1} parent=0
    _
  %s7 = ssub.s32 1, %s5
  %s8 = scalar_select 0, %s7, %s5
  $region1: #{tpu_custom_call.1} parent=0
    #allocation4 [shape = 'u8[2048]{0}', space=vmem, size = 0x800, scoped, tag = 'input window, operand 0']
    #allocation5 [shape = 's32[2]{0}', space=sflag, size = 0x8, scoped, tag = 'scoped memory for tpu_custom_call.1']
    #allocation6 [shape = 'u8[2048]{0}', space=vmem, size = 0x800, scoped, tag = 'input window, operand 1']
    #allocation7 [shape = 's32[2]{0}', space=sflag, size = 0x8, scoped, tag = 'scoped memory for tpu_custom_call.1']
    %9 = vsyncpa [#allocation5], 0
    %s10 = scalar_lea.sflag [#allocation5], 1
    %11 = vsyncpa %s10, 0
    %12 = vsyncpa [#allocation7], 0
    %s13 = scalar_lea.sflag [#allocation7], 1
    %14 = vsyncpa %s13, 0
    loop: start=0, step=1, limit=10
    $region2: #{tpu_custom_call.1} parent=1 // loop_pre_header
      _
    $region3: #{tpu_custom_call.1} parent=1 // loop_header
      %s16 = sphi 0, %s20
      %p17 = scmp.ge.s32.totalorder %s16, 10
      %s23 = sphi 0, %s42
      %s24 = sphi 0, %s38
      %s25 = sphi 0, %s34
      %s26 = sphi 0, %s23
      %s27 = sphi 0, %s24
      %s28 = sphi 0, %s25
      %s29 = sphi 0, %s26
      %s30 = sphi 0, %s27
      %s31 = sphi 0, %s28
      %s49 = sphi 0, %s51
      %s52 = sphi 0, %s49
      %s53 = sphi 0, %s52
      %s69 = sphi 0, %s53
      %s79 = sphi 0, %s81
      %s82 = sphi 0, %s79
      %s83 = sphi 0, %s82
      %s99 = sphi 0, %s83
      %s107 = sphi 0, %s109
      %s110 = sphi 0, %s107
      %s111 = sphi 0, %s110
      %s127 = sphi 0, %s111
      %s135 = sphi 0, %s137
      %s138 = sphi 0, %s135
      %s139 = sphi 0, %s138
      %s155 = sphi 0, %s139
    $region4: #{tpu_custom_call.1} parent=1 // loop_header_branch
      %19 = sbr.rel (%p17) target = $region8
    $region5: #{tpu_custom_call.1} parent=1 // loop_body
      %s21 = ssub.s32 %s16, 1
      %s22 = ssub.s32 %s16, 2
      %s32 = sadd.s32 1, %s25
      %p33 = scmp.ge.s32.totalorder %s32, 1
      %s34 = scalar_select %p33, 0, %s32
      %s35 = sadd.s32 1, %s24
      %s36 = scalar_select %p33, %s35, %s24
      %p37 = scmp.ge.s32.totalorder %s36, 4
      %s38 = scalar_select %p37, 0, %s36
      %s39 = sadd.s32 1, %s23
      %s40 = scalar_select %p37, %s39, %s23
      %p41 = scmp.ge.s32.totalorder %s40, 2
      %s42 = scalar_select %p41, 0, %s40
      %s43 = ssub.s32 %s23, %s42
      %s44 = ssub.s32 %s24, %s38
      %s45 = sor.u32 %s43, %s44
      %s46 = ssub.s32 %s25, %s34
      %s47 = sor.u32 %s45, %s46
      %p48 = scmp.eq.s32.totalorder %s47, 0
      %s50 = sadd.s32 %s49, 1
      %s51 = scalar_select %p48, %s49, %s50
      %p54 = pneg %p48
      %p55 = scmp.eq.s32.totalorder %s16, 7
      %p56 = por %p54, %p55
      %p57 = scmp.ne.s32.totalorder %s49, %s52
      %p58 = scmp.eq.s32.totalorder %s16, 0
      %p59 = por %p57, %p58
      %p60 = scmp.ne.s32.totalorder %s49, %s52
      %p61 = scmp.eq.s32.totalorder %s21, 7
      %p62 = por %p60, %p61
      %p63 = scmp.ne.s32.totalorder %s52, %s53
      %p64 = scmp.eq.s32.totalorder %s21, 0
      %p65 = por %p63, %p64
      %p66 = scmp.ne.s32.totalorder %s52, %s53
      %p67 = scmp.eq.s32.totalorder %s22, 7
      %p68 = por %p66, %p67
      %p70 = scmp.ne.s32.totalorder %s53, %s69
      %p71 = scmp.eq.s32.totalorder %s22, 0
      %p72 = por %p70, %p71
      %s73 = ssub.s32 %s23, %s42
      %s74 = ssub.s32 %s24, %s38
      %s75 = sor.u32 %s73, %s74
      %s76 = ssub.s32 %s25, %s34
      %s77 = sor.u32 %s75, %s76
      %p78 = scmp.eq.s32.totalorder %s77, 0
      %s80 = sadd.s32 %s79, 1
      %s81 = scalar_select %p78, %s79, %s80
      %p84 = pneg %p78
      %p85 = scmp.eq.s32.totalorder %s16, 7
      %p86 = por %p84, %p85
      %p87 = scmp.ne.s32.totalorder %s79, %s82
      %p88 = scmp.eq.s32.totalorder %s16, 0
      %p89 = por %p87, %p88
      %p90 = scmp.ne.s32.totalorder %s79, %s82
      %p91 = scmp.eq.s32.totalorder %s21, 7
      %p92 = por %p90, %p91
      %p93 = scmp.ne.s32.totalorder %s82, %s83
      %p94 = scmp.eq.s32.totalorder %s21, 0
      %p95 = por %p93, %p94
      %p96 = scmp.ne.s32.totalorder %s82, %s83
      %p97 = scmp.eq.s32.totalorder %s22, 7
      %p98 = por %p96, %p97
      %p100 = scmp.ne.s32.totalorder %s83, %s99
      %p101 = scmp.eq.s32.totalorder %s22, 0
      %p102 = por %p100, %p101
      %s103 = ssub.s32 %s23, %s42
      %s104 = ssub.s32 %s24, %s38
      %s105 = sor.u32 %s103, %s104
      %p106 = scmp.eq.s32.totalorder %s105, 0
      %s108 = sadd.s32 %s107, 1
      %s109 = scalar_select %p106, %s107, %s108
      %p112 = pneg %p106
      %p113 = scmp.eq.s32.totalorder %s16, 7
      %p114 = por %p112, %p113
      %p115 = scmp.ne.s32.totalorder %s107, %s110
      %p116 = scmp.eq.s32.totalorder %s16, 0
      %p117 = por %p115, %p116
      %p118 = scmp.ne.s32.totalorder %s107, %s110
      %p119 = scmp.eq.s32.totalorder %s21, 7
      %p120 = por %p118, %p119
      %p121 = scmp.ne.s32.totalorder %s110, %s111
      %p122 = scmp.eq.s32.totalorder %s21, 0
      %p123 = por %p121, %p122
      %p124 = scmp.ne.s32.totalorder %s110, %s111
      %p125 = scmp.eq.s32.totalorder %s22, 7
      %p126 = por %p124, %p125
      %p128 = scmp.ne.s32.totalorder %s111, %s127
      %p129 = scmp.eq.s32.totalorder %s22, 0
      %p130 = por %p128, %p129
      %s131 = ssub.s32 %s23, %s42
      %s132 = ssub.s32 %s24, %s38
      %s133 = sor.u32 %s131, %s132
      %p134 = scmp.eq.s32.totalorder %s133, 0
      %s136 = sadd.s32 %s135, 1
      %s137 = scalar_select %p134, %s135, %s136
      %p140 = pneg %p134
      %p141 = scmp.eq.s32.totalorder %s16, 7
      %p142 = por %p140, %p141
      %p143 = scmp.ne.s32.totalorder %s135, %s138
      %p144 = scmp.eq.s32.totalorder %s16, 0
      %p145 = por %p143, %p144
      %p146 = scmp.ne.s32.totalorder %s135, %s138
      %p147 = scmp.eq.s32.totalorder %s21, 7
      %p148 = por %p146, %p147
      %p149 = scmp.ne.s32.totalorder %s138, %s139
      %p150 = scmp.eq.s32.totalorder %s21, 0
      %p151 = por %p149, %p150
      %p152 = scmp.ne.s32.totalorder %s138, %s139
      %p153 = scmp.eq.s32.totalorder %s22, 7
      %p154 = por %p152, %p153
      %p156 = scmp.ne.s32.totalorder %s139, %s155
      %p157 = scmp.eq.s32.totalorder %s22, 0
      %p158 = por %p156, %p157
      %p159 = scmp.le.s32.totalorder 1, %s16
      %p160 = scmp.lt.s32.totalorder %s16, 9
      %p161 = pnand %p159, %p160
      %p162 = pneg %p161
      // Predicated region
      $region9: #{tpu_custom_call.1} parent=5 // pred_check
        _
      $region10: #{tpu_custom_call.1} parent=5 // pred_check_branch
        %164 = sbr.rel (%p161) target = $region12
      $region11: #{tpu_custom_call.1} parent=5 // pred_region
        %s165 = ssub.s32 %s16, 1
      $region12: #{tpu_custom_call.1} parent=5 // pred_fallthru
        _
      %p166 = scmp.lt.s32.totalorder %s16, 8
      // Predicated region
      $region13: #{tpu_custom_call.1} parent=5 // pred_check
        %p167 = pneg %p166
      $region14: #{tpu_custom_call.1} parent=5 // pred_check_branch
        %169 = sbr.rel (%p167) target = $region16
      $region15: #{tpu_custom_call.1} parent=5 // pred_region
        // Predicated region
        $region17: #{tpu_custom_call.1} parent=15 // pred_check
          %p170 = pneg %p59
        $region18: #{tpu_custom_call.1} parent=15 // pred_check_branch
          %172 = sbr.rel (%p170) target = $region20
        $region19: #{tpu_custom_call.1} parent=15 // pred_region
          %s173 = sand.u32 %s49, 1
          %s174 = scalar_lea.sflag [#allocation5], %s173
          %s175 = sand.u32 %s49, 1
          %s176 = smul.addr %s175, 2
          %s177 = scalar_lea.vmem [#allocation4], %s176
          %s179 = ssub.s32 32, 32
          %180 = vsyncadd %s174, %s179
          %s181 = sadd.s32 %s25, %s24
          %s182 = smul.addr %s23, 4
          %s183 = sadd.s32 %s181, %s182
          %s184 = smul.addr %s183, 32
          %s185 = scalar_lea.hbm %s0, %s184
          %s187 = sshll.u32 %s177, 4
          %s188 = int_to_ptr.vmem [resolvable:$true] %s187
          %190 = dma.hbm_to_vmem [thread:$0]  %s185, 32, %s188, %s174
        $region20: #{tpu_custom_call.1} parent=15 // pred_fallthru
          _
        // Predicated region
        $region21: #{tpu_custom_call.1} parent=15 // pred_check
          %p191 = pneg %p89
        $region22: #{tpu_custom_call.1} parent=15 // pred_check_branch
          %193 = sbr.rel (%p191) target = $region24
        $region23: #{tpu_custom_call.1} parent=15 // pred_region
          %s194 = sand.u32 %s79, 1
          %s195 = scalar_lea.sflag [#allocation7], %s194
          %s196 = sand.u32 %s79, 1
          %s197 = smul.addr %s196, 2
          %s198 = scalar_lea.vmem [#allocation6], %s197
          %s200 = ssub.s32 32, 32
          %201 = vsyncadd %s195, %s200
          %s202 = sadd.s32 %s25, %s24
          %s203 = smul.addr %s23, 4
          %s204 = sadd.s32 %s202, %s203
          %s205 = smul.addr %s204, 32
          %s206 = scalar_lea.hbm %s1, %s205
          %s208 = sshll.u32 %s198, 4
          %s209 = int_to_ptr.vmem [resolvable:$true] %s208
          %211 = dma.hbm_to_vmem [thread:$0]  %s206, 32, %s209, %s195
        $region24: #{tpu_custom_call.1} parent=15 // pred_fallthru
          _
      $region16: #{tpu_custom_call.1} parent=5 // pred_fallthru
        _
      %p212 = scmp.le.s32.totalorder 1, %s16
      %p213 = scmp.lt.s32.totalorder %s16, 9
      %p214 = pnand %p212, %p213
      %p215 = pneg %p214
      // Predicated region
      $region25: #{tpu_custom_call.1} parent=5 // pred_check
        _
      $region26: #{tpu_custom_call.1} parent=5 // pred_check_branch
        %217 = sbr.rel (%p214) target = $region28
      $region27: #{tpu_custom_call.1} parent=5 // pred_region
        %s218 = ssub.s32 %s16, 1
        %s219 = sand.u32 %s52, 1
        %s220 = scalar_lea.sflag [#allocation5], %s219
        %s221 = sand.u32 %s52, 1
        %s222 = smul.addr %s221, 2
        %s223 = scalar_lea.vmem [#allocation4], %s222
        // Predicated region
        $region29: #{tpu_custom_call.1} parent=27 // pred_check
          %p224 = pneg %p65
        $region30: #{tpu_custom_call.1} parent=27 // pred_check_branch
          %226 = sbr.rel (%p224) target = $region32
        $region31: #{tpu_custom_call.1} parent=27 // pred_region
          %227 = dma.done %s220, 32
        $region32: #{tpu_custom_call.1} parent=27 // pred_fallthru
          _
        %s228 = sand.u32 %s82, 1
        %s229 = scalar_lea.sflag [#allocation7], %s228
        %s230 = sand.u32 %s82, 1
        %s231 = smul.addr %s230, 2
        %s232 = scalar_lea.vmem [#allocation6], %s231
        // Predicated region
        $region33: #{tpu_custom_call.1} parent=27 // pred_check
          %p233 = pneg %p95
        $region34: #{tpu_custom_call.1} parent=27 // pred_check_branch
          %235 = sbr.rel (%p233) target = $region36
        $region35: #{tpu_custom_call.1} parent=27 // pred_region
          %236 = dma.done %s229, 32
        $region36: #{tpu_custom_call.1} parent=27 // pred_fallthru
          _
        %s237 = sand.u32 %s52, 1
        %s238 = scalar_lea.sflag [#allocation5], %s237
        %s239 = sand.u32 %s52, 1
        %s240 = smul.addr %s239, 2
        %s241 = scalar_lea.vmem [#allocation4], %s240
        %p242 = pneg %p65
        %p243 = pneg %p62
        %s244 = sand.u32 %s82, 1
        %s245 = scalar_lea.sflag [#allocation7], %s244
        %s246 = sand.u32 %s82, 1
        %s247 = smul.addr %s246, 2
        %s248 = scalar_lea.vmem [#allocation6], %s247
        %p249 = pneg %p95
        %p250 = pneg %p92
        %p251 = pneg %p123
        %p252 = pneg %p120
        %p253 = scmp.lt.s32.totalorder %s26, 1
        %s254 = scalar_select %p253, %s26, 1
        %p255 = scmp.lt.s32.totalorder %s27, 3
        %s256 = scalar_select %p255, %s27, 3
        %s257 = smul.addr %s254, 4
        %s258 = sadd.s32 %s256, %s257
        %s259 = scalar_lea.vmem %s2, %s258
        %p260 = pneg %p151
        %p261 = pneg %p148
        %p262 = scmp.lt.s32.totalorder %s26, 1
        %s263 = scalar_select %p262, %s26, 1
        %p264 = scmp.lt.s32.totalorder %s27, 3
        %s265 = scalar_select %p264, %s27, 3
        %s266 = smul.addr %s263, 4
        %s267 = sadd.s32 %s265, %s266
        %s268 = scalar_lea.vmem %s3, %s267
        %p269 = scmp.lt.s32.totalorder %s26, 1
        %s270 = scalar_select %p269, %s26, 1
        %p271 = scmp.lt.s32.totalorder %s27, 3
        %s272 = scalar_select %p271, %s27, 3
        %s273 = smul.addr %s270, 4
        %s274 = sadd.s32 %s272, %s273
        %s275 = scalar_lea.vmem %s2, %s274
        %p276 = scmp.lt.s32.totalorder %s26, 1
        %s277 = scalar_select %p276, %s26, 1
        %p278 = scmp.lt.s32.totalorder %s27, 3
        %s279 = scalar_select %p278, %s27, 3
        %s280 = smul.addr %s277, 4
        %s281 = sadd.s32 %s279, %s280
        %s282 = scalar_lea.vmem %s3, %s281
        %p283 = scmp.eq.s32.totalorder %s28, 0
        // Predicated region
        $region37: #{tpu_custom_call.1} parent=27 // pred_check
          %p284 = pneg %p283
        $region38: #{tpu_custom_call.1} parent=27 // pred_check_branch
          %286 = sbr.rel (%p284) target = $region40
        $region39: #{tpu_custom_call.1} parent=27 // pred_region
          %287 = vst [vmem:[#allocation2] sm:$0xff] 0.0
          %288 = vst [vmem:[#allocation3] sm:$0xff] 0.0
        $region40: #{tpu_custom_call.1} parent=27 // pred_fallthru
          _
        %v289 = vld [vmem:[#allocation2] sm:$0xff]
        %v290 = vadd.f32 %v289, 0.0
        %291 = vst [vmem:[#allocation2] sm:$0xff] %v290
        %v292 = vld [vmem:[#allocation3] sm:$0xff]
        %v293 = vadd.f32 %v292, 0.0
        %294 = vst [vmem:[#allocation3] sm:$0xff] %v293
        %v295 = vld [vmem:[%s223] sm:$0x3]
        %v296 = vld [vmem:[%s232] sm:$0x3]
        %v297 = vld [vmem:[#allocation2] sm:$0x3]
        %v298 = vmul.f32 %v295, %v296
        %v299 = vadd.f32 %v297, %v298
        %300 = vst [vmem:[#allocation2] sm:$0x3] %v299
        %v301 = vld [vmem:[#allocation3] sm:$0x3]
        %v302 = vadd.f32 %v295, %v296
        %v303 = vadd.f32 %v301, %v302
        %304 = vst [vmem:[#allocation3] sm:$0x3] %v303
        // Predicated region
        $region41: #{tpu_custom_call.1} parent=27 // pred_check
          %p305 = pneg %p283
        $region42: #{tpu_custom_call.1} parent=27 // pred_check_branch
          %307 = sbr.rel (%p305) target = $region44
        $region43: #{tpu_custom_call.1} parent=27 // pred_region
          %v308 = vld [vmem:[#allocation2] sm:$0xff]
          %309 = vadd.xlane.f32.xlu0 %v308
          %v310 = vpop.xlane.xlu0 %309
          %v311 = vrot.slane %v310, 4
          %v312 = vadd.f32 %v310, %v311
          %v313 = vrot.slane %v312, 2
          %v314 = vadd.f32 %v312, %v313
          %v315 = vrot.slane %v314, 1
          %v316 = vadd.f32 %v314, %v315
          %s317 = vtos %v316
          %v318 = vstv %s317
          %vm319 = vcmask 0
          %320 = vst.msk [vmem:[%s275] sm:$0x1] %vm319, %v318
          %v321 = vld [vmem:[#allocation3] sm:$0xff]
          %322 = vadd.xlane.f32.xlu0 %v321
          %v323 = vpop.xlane.xlu0 %322
          %v324 = vrot.slane %v323, 4
          %v325 = vadd.f32 %v323, %v324
          %v326 = vrot.slane %v325, 2
          %v327 = vadd.f32 %v325, %v326
          %v328 = vrot.slane %v327, 1
          %v329 = vadd.f32 %v327, %v328
          %s330 = vtos %v329
          %v331 = vstv %s330
          %332 = vst.msk [vmem:[%s282] sm:$0x1] %vm319, %v331
        $region44: #{tpu_custom_call.1} parent=27 // pred_fallthru
          _
        %p333 = scmp.lt.s32.totalorder %s26, 1
        %s334 = scalar_select %p333, %s26, 1
        %p335 = scmp.lt.s32.totalorder %s27, 3
        %s336 = scalar_select %p335, %s27, 3
        %s337 = smul.addr %s334, 4
        %s338 = sadd.s32 %s336, %s337
        %s339 = scalar_lea.vmem %s2, %s338
        %p340 = scmp.lt.s32.totalorder %s26, 1
        %s341 = scalar_select %p340, %s26, 1
        %p342 = scmp.lt.s32.totalorder %s27, 3
        %s343 = scalar_select %p342, %s27, 3
        %s344 = smul.addr %s341, 4
        %s345 = sadd.s32 %s343, %s344
        %s346 = scalar_lea.vmem %s3, %s345
        // Predicated region
        $region45: #{tpu_custom_call.1} parent=27 // pred_check
          %p347 = pneg %p120
        $region46: #{tpu_custom_call.1} parent=27 // pred_check_branch
          %349 = sbr.rel (%p347) target = $region48
        $region47: #{tpu_custom_call.1} parent=27 // pred_region
          _
        $region48: #{tpu_custom_call.1} parent=27 // pred_fallthru
          _
        // Predicated region
        $region49: #{tpu_custom_call.1} parent=27 // pred_check
          %p350 = pneg %p148
        $region50: #{tpu_custom_call.1} parent=27 // pred_check_branch
          %352 = sbr.rel (%p350) target = $region52
        $region51: #{tpu_custom_call.1} parent=27 // pred_region
          _
        $region52: #{tpu_custom_call.1} parent=27 // pred_fallthru
          _
      $region28: #{tpu_custom_call.1} parent=5 // pred_fallthru
        _
      %p353 = scmp.le.s32.totalorder 2, %s16
      // Predicated region
      $region53: #{tpu_custom_call.1} parent=5 // pred_check
        %p354 = pneg %p353
      $region54: #{tpu_custom_call.1} parent=5 // pred_check_branch
        %356 = sbr.rel (%p354) target = $region56
      $region55: #{tpu_custom_call.1} parent=5 // pred_region
        %s357 = ssub.s32 %s16, 2
        // Predicated region
        $region57: #{tpu_custom_call.1} parent=55 // pred_check
          %p358 = pneg %p126
        $region58: #{tpu_custom_call.1} parent=55 // pred_check_branch
          %360 = sbr.rel (%p358) target = $region60
        $region59: #{tpu_custom_call.1} parent=55 // pred_region
          %p361 = scmp.lt.s32.totalorder %s29, 1
          %s362 = scalar_select %p361, %s29, 1
          %p363 = scmp.lt.s32.totalorder %s30, 3
          %s364 = scalar_select %p363, %s30, 3
          %s365 = smul.addr %s362, 4
          %s366 = sadd.s32 %s364, %s365
          %s367 = scalar_lea.vmem %s2, %s366
        $region60: #{tpu_custom_call.1} parent=55 // pred_fallthru
          _
        // Predicated region
        $region61: #{tpu_custom_call.1} parent=55 // pred_check
          %p368 = pneg %p154
        $region62: #{tpu_custom_call.1} parent=55 // pred_check_branch
          %370 = sbr.rel (%p368) target = $region64
        $region63: #{tpu_custom_call.1} parent=55 // pred_region
          %p371 = scmp.lt.s32.totalorder %s29, 1
          %s372 = scalar_select %p371, %s29, 1
          %p373 = scmp.lt.s32.totalorder %s30, 3
          %s374 = scalar_select %p373, %s30, 3
          %s375 = smul.addr %s372, 4
          %s376 = sadd.s32 %s374, %s375
          %s377 = scalar_lea.vmem %s3, %s376
        $region64: #{tpu_custom_call.1} parent=55 // pred_fallthru
          _
      $region56: #{tpu_custom_call.1} parent=5 // pred_fallthru
        _
    $region6: #{tpu_custom_call.1} parent=1 // loop_footer
      %s20 = sadd.s32 1, %s16
    $region7: #{tpu_custom_call.1} parent=1 // loop_footer_branch
      %15 = sbr.rel target = $region3
    $region8: #{tpu_custom_call.1} parent=1 // loop_exit
      _
    %378 = vsyncpa [#allocation5], 1
    %s379 = scalar_lea.sflag [#allocation5], 1
    %380 = vsyncpa %s379, 1
    %381 = vsyncpa [#allocation7], 1
    %s382 = scalar_lea.sflag [#allocation7], 1
    %383 = vsyncpa %s382, 1

</llo_original>
